<compile_context>
chip_gen: v7x
topology: tpu7x:2x2x1
jax: 0.10.0
libtpu: 0.0.40
codegen_flags: <defaults>
</compile_context>

<pallas_src>
import numpy as np
import jax
import jax.numpy as jnp
from jax import lax
from jax.experimental import pallas as pl
from jax.experimental.pallas import tpu as pltpu


def skip_block_kernel(x_ref, a_ref, b_ref, m_ref, o_ref):
    # x_ref: (1, H, W*Cin)       input rows, lane-flattened NHWC
    # a_ref: (3, W*Cin, W*Ctot)  banded conv+skip matrices for ky = 0, 1, 2
    # b_ref: (1, W*Ctot)         bias (zero on skip lanes)
    # m_ref: (1, W*Ctot)         1.0 on conv lanes (ReLU applies), 0.0 on skip lanes
    # o_ref: (1, H, W*Ctot)      cat([ReLU(conv3x3(x)+b), x]) in lane-dense layout
    h_dim = x_ref.shape[1]
    xf = x_ref[0].astype(jnp.float32)                     # (H, W*Cin)

    # Zero-padded row-shift matrices built from 2-D iotas, applied on the MXU:
    #   x_up[h] = x[h-1] (0 at h=0),  x_dn[h] = x[h+1] (0 at h=H-1).
    r = lax.broadcasted_iota(jnp.int32, (h_dim, h_dim), 0)
    c = lax.broadcasted_iota(jnp.int32, (h_dim, h_dim), 1)
    s_down = (r == c + 1).astype(jnp.float32)
    s_up = (c == r + 1).astype(jnp.float32)
    x_up = jnp.dot(s_down, xf, preferred_element_type=jnp.float32)
    x_dn = jnp.dot(s_up, xf, preferred_element_type=jnp.float32)

    # 3x3 conv + identity skip for all output lanes at once.
    acc = jnp.dot(x_up, a_ref[0], preferred_element_type=jnp.float32)
    acc += jnp.dot(xf, a_ref[1], preferred_element_type=jnp.float32)
    acc += jnp.dot(x_dn, a_ref[2], preferred_element_type=jnp.float32)

    z = acc + b_ref[...]                                  # bias (0 on skip lanes)
    gate = m_ref[...]                                     # 1.0 conv lanes, 0.0 skip
    out = z + gate * (jnp.maximum(z, 0.0) - z)            # ReLU on conv lanes only
    o_ref[0] = out.astype(o_ref.dtype)


def _build_banded_weights(w_oihw, bias, width):
    """Fold the 3x3 conv (with zero padding along W) and the identity skip into
    three (width*Cin, width*Ctot) matrices, one per kernel row ky, plus a
    per-lane bias vector and a per-lane ReLU gate."""
    cout, cin, kh, kw = w_oihw.shape
    ctot = cout + cin
    w_hwio = jnp.transpose(w_oihw, (2, 3, 1, 0))          # (kh, kw, Cin, Cout)

    # sel[kx, p, q] = 1 iff input column p == q + kx - 1 (zero padding along W).
    sel = np.zeros((kw, width, width), np.float32)
    for kx in range(kw):
        for q in range(width):
            p = q + kx - 1
            if 0 <= p < width:
                sel[kx, p, q] = 1.0

    # Conv part: a_main[ky, p, ci, q, co].
    a_main = jnp.einsum("kpq,ykio->ypiqo", jnp.asarray(sel), w_hwio)
    # Skip part (identity copy of the centre pixel): a_skip[ky, p, ci, q, cs].
    a_skip = np.zeros((kh, width, cin, width, cin), np.float32)
    a_skip[kh // 2] = np.einsum(
        "pq,ic->piqc", np.eye(width, dtype=np.float32), np.eye(cin, dtype=np.float32))
    a = jnp.concatenate([a_main, jnp.asarray(a_skip)], axis=-1)  # (kh, W, Cin, W, Ctot)
    a = a.reshape(kh, width * cin, width * ctot)

    lane_bias = jnp.tile(
        jnp.concatenate([bias.astype(jnp.float32), jnp.zeros((cin,), jnp.float32)]),
        width).reshape(1, width * ctot)
    lane_gate = jnp.tile(
        jnp.concatenate([jnp.ones((cout,), jnp.float32), jnp.zeros((cin,), jnp.float32)]),
        width).reshape(1, width * ctot)
    return a, lane_bias, lane_gate


def skip_block(x_nchw, w_oihw, bias):
    """SkipBlock forward: cat([ReLU(conv3x3(x)+b), x], dim=1).

    x_nchw: (B, Cin, H, W) -> (B, Cout+Cin, H, W).
    """
    batch, cin, height, width = x_nchw.shape
    cout = w_oihw.shape[0]
    ctot = cout + cin

    # NCHW -> (B, H, W*Cin).  Boundary-only layout conversion (see module note).
    x2d = jnp.transpose(x_nchw, (0, 2, 3, 1)).reshape(batch, height, width * cin)
    a, lane_bias, lane_gate = _build_banded_weights(w_oihw, bias, width)

    out2d = pl.pallas_call(
        skip_block_kernel,
        out_shape=jax.ShapeDtypeStruct((batch, height, width * ctot), x_nchw.dtype),
        grid_spec=pltpu.PrefetchScalarGridSpec(
            num_scalar_prefetch=0,
            grid=(batch,),
            in_specs=[
                pl.BlockSpec((1, height, width * cin), lambda i: (i, 0, 0)),
                pl.BlockSpec((3, width * cin, width * ctot), lambda i: (0, 0, 0)),
                pl.BlockSpec((1, width * ctot), lambda i: (0, 0)),
                pl.BlockSpec((1, width * ctot), lambda i: (0, 0)),
            ],
            out_specs=pl.BlockSpec((1, height, width * ctot),
                                   lambda i: (i, 0, 0)),
        ),
        compiler_params=pltpu.CompilerParams(
            dimension_semantics=("parallel",)),
    )(x2d, a, lane_bias, lane_gate)

    out_nhwc = out2d.reshape(batch, height, width, ctot)
    return jnp.transpose(out_nhwc, (0, 3, 1, 2))          # NHWC -> NCHW


if __name__ == "__main__":
    key = jax.random.PRNGKey(0)
    k1, k2, k3 = jax.random.split(key, 3)

    B, Cin, H, W = 2, 4, 16, 16
    Cout = 4

    x = jax.random.normal(k1, (B, Cin, H, W), jnp.float32)
    w = jax.random.normal(k2, (Cout, Cin, 3, 3), jnp.float32) * 0.1
    b = jax.random.normal(k3, (Cout,), jnp.float32) * 0.1

    out = skip_block(x, w, b)
    out = jax.block_until_ready(out)

    # Pure-JAX reference of the same SkipBlock instantiation.
    conv = lax.conv_general_dilated(
        x, w, window_strides=(1, 1), padding=((1, 1), (1, 1)),
        dimension_numbers=("NCHW", "OIHW", "NCHW"))
    ref = jnp.concatenate(
        [jnp.maximum(conv + b[None, :, None, None], 0.0), x], axis=1)

    assert out.shape == (B, Cout + Cin, H, W)
    assert jnp.allclose(out, ref, atol=1e-4, rtol=1e-4)
    print("KERNEL_OK")
</pallas_src>

<mosaic_0001>
module attributes {stable_mosaic.version = 11 : i64} {
  func.func @skip_block_kernel(%arg0: i32, %arg1: memref<1x16x64xf32, #tpu.memory_space<vmem>>, %arg2: memref<3x64x128xf32, #tpu.memory_space<vmem>>, %arg3: memref<1x128xf32, #tpu.memory_space<vmem>>, %arg4: memref<1x128xf32, #tpu.memory_space<vmem>>, %arg5: memref<1x16x128xf32, #tpu.memory_space<vmem>>) attributes {dimension_semantics = [#tpu.dimension_semantics<parallel>], iteration_bounds = array<i64: 2>, scalar_prefetch = 0 : i64, scratch_operands = 0 : i64, tpu.core_type = #tpu.core_type<tc>, window_params = [{transform_indices = @transform_0, window_bounds = array<i64: 1, 16, 64>}, {pipeline_mode = #tpu.pipeline_mode<synchronous>, transform_indices = @transform_1, window_bounds = array<i64: 3, 64, 128>}, {pipeline_mode = #tpu.pipeline_mode<synchronous>, transform_indices = @transform_2, window_bounds = array<i64: 1, 128>}, {pipeline_mode = #tpu.pipeline_mode<synchronous>, transform_indices = @transform_3, window_bounds = array<i64: 1, 128>}, {transform_indices = @transform_4, window_bounds = array<i64: 1, 16, 128>}]} {
    %c0 = arith.constant 0 : index
    %c0_0 = arith.constant 0 : index
    %c0_1 = arith.constant 0 : index
    %0 = vector.load %arg1[%c0, %c0_0, %c0_1] : memref<1x16x64xf32, #tpu.memory_space<vmem>>, vector<1x16x64xf32>
    %1 = vector.shape_cast %0 : vector<1x16x64xf32> to vector<16x64xf32>
    %2 = tpu.iota {dimensions = array<i32: 0>} : vector<16x16xi32>
    %3 = tpu.iota {dimensions = array<i32: 1>} : vector<16x16xi32>
    %c1_i32 = arith.constant 1 : i32
    %4 = vector.broadcast %c1_i32 : i32 to vector<16x16xi32>
    %5 = arith.addi %3, %4 : vector<16x16xi32>
    %6 = arith.cmpi eq, %2, %5 : vector<16x16xi32>
    %7 = arith.extui %6 : vector<16x16xi1> to vector<16x16xi32>
    %8 = arith.sitofp %7 : vector<16x16xi32> to vector<16x16xf32>
    %c1_i32_2 = arith.constant 1 : i32
    %9 = vector.broadcast %c1_i32_2 : i32 to vector<16x16xi32>
    %10 = arith.addi %2, %9 : vector<16x16xi32>
    %11 = arith.cmpi eq, %3, %10 : vector<16x16xi32>
    %12 = arith.extui %11 : vector<16x16xi1> to vector<16x16xi32>
    %13 = arith.sitofp %12 : vector<16x16xi32> to vector<16x16xf32>
    %cst = arith.constant dense<0.000000e+00> : vector<16x64xf32>
    %14 = tpu.matmul %8, %1, %cst {dimension_numbers = #tpu.dot_dimension_numbers<[1], [0], [0], [1], [0, 0, 1, 1], [], []>} : vector<16x16xf32>, vector<16x64xf32>, vector<16x64xf32> -> vector<16x64xf32>
    %cst_3 = arith.constant dense<0.000000e+00> : vector<16x64xf32>
    %15 = tpu.matmul %13, %1, %cst_3 {dimension_numbers = #tpu.dot_dimension_numbers<[1], [0], [0], [1], [0, 0, 1, 1], [], []>} : vector<16x16xf32>, vector<16x64xf32>, vector<16x64xf32> -> vector<16x64xf32>
    %c0_4 = arith.constant 0 : index
    %c0_5 = arith.constant 0 : index
    %c0_6 = arith.constant 0 : index
    %16 = vector.load %arg2[%c0_4, %c0_5, %c0_6] : memref<3x64x128xf32, #tpu.memory_space<vmem>>, vector<1x64x128xf32>
    %17 = vector.shape_cast %16 : vector<1x64x128xf32> to vector<64x128xf32>
    %cst_7 = arith.constant dense<0.000000e+00> : vector<16x128xf32>
    %18 = tpu.matmul %14, %17, %cst_7 {dimension_numbers = #tpu.dot_dimension_numbers<[1], [0], [0], [1], [0, 0, 1, 1], [], []>} : vector<16x64xf32>, vector<64x128xf32>, vector<16x128xf32> -> vector<16x128xf32>
    %c1 = arith.constant 1 : index
    %c0_8 = arith.constant 0 : index
    %c0_9 = arith.constant 0 : index
    %19 = vector.load %arg2[%c1, %c0_8, %c0_9] : memref<3x64x128xf32, #tpu.memory_space<vmem>>, vector<1x64x128xf32>
    %20 = vector.shape_cast %19 : vector<1x64x128xf32> to vector<64x128xf32>
    %cst_10 = arith.constant dense<0.000000e+00> : vector<16x128xf32>
    %21 = tpu.matmul %1, %20, %cst_10 {dimension_numbers = #tpu.dot_dimension_numbers<[1], [0], [0], [1], [0, 0, 1, 1], [], []>} : vector<16x64xf32>, vector<64x128xf32>, vector<16x128xf32> -> vector<16x128xf32>
    %22 = arith.addf %18, %21 : vector<16x128xf32>
    %c2 = arith.constant 2 : index
    %c0_11 = arith.constant 0 : index
    %c0_12 = arith.constant 0 : index
    %23 = vector.load %arg2[%c2, %c0_11, %c0_12] : memref<3x64x128xf32, #tpu.memory_space<vmem>>, vector<1x64x128xf32>
    %24 = vector.shape_cast %23 : vector<1x64x128xf32> to vector<64x128xf32>
    %cst_13 = arith.constant dense<0.000000e+00> : vector<16x128xf32>
    %25 = tpu.matmul %15, %24, %cst_13 {dimension_numbers = #tpu.dot_dimension_numbers<[1], [0], [0], [1], [0, 0, 1, 1], [], []>} : vector<16x64xf32>, vector<64x128xf32>, vector<16x128xf32> -> vector<16x128xf32>
    %26 = arith.addf %22, %25 : vector<16x128xf32>
    %c0_14 = arith.constant 0 : index
    %c0_15 = arith.constant 0 : index
    %27 = vector.load %arg3[%c0_14, %c0_15] : memref<1x128xf32, #tpu.memory_space<vmem>>, vector<1x128xf32>
    %28 = vector.broadcast %27 : vector<1x128xf32> to vector<16x128xf32>
    %29 = arith.addf %26, %28 : vector<16x128xf32>
    %c0_16 = arith.constant 0 : index
    %c0_17 = arith.constant 0 : index
    %30 = vector.load %arg4[%c0_16, %c0_17] : memref<1x128xf32, #tpu.memory_space<vmem>>, vector<1x128xf32>
    %cst_18 = arith.constant 0.000000e+00 : f32
    %31 = vector.broadcast %cst_18 : f32 to vector<16x128xf32>
    %32 = arith.maximumf %29, %31 : vector<16x128xf32>
    %33 = arith.subf %32, %29 : vector<16x128xf32>
    %34 = vector.broadcast %30 : vector<1x128xf32> to vector<16x128xf32>
    %35 = arith.mulf %34, %33 : vector<16x128xf32>
    %36 = arith.addf %29, %35 : vector<16x128xf32>
    %c0_19 = arith.constant 0 : index
    %c0_20 = arith.constant 0 : index
    %c0_21 = arith.constant 0 : index
    %37 = vector.load %arg5[%c0_19, %c0_20, %c0_21] : memref<1x16x128xf32, #tpu.memory_space<vmem>>, vector<1x16x128xf32>
    %38 = vector.shape_cast %37 : vector<1x16x128xf32> to vector<16x128xf32>
    %39 = vector.shape_cast %36 : vector<16x128xf32> to vector<1x16x128xf32>
    tpu.vector_store %arg5[%c0_19, %c0_20, %c0_21], %39 {strides = array<i32>} : memref<1x16x128xf32, #tpu.memory_space<vmem>>, vector<1x16x128xf32>,
    return
  }
  func.func @transform_0(%arg0: i32) -> (i32, i32, i32) {
    %c0_i32 = arith.constant 0 : i32
    %c0_i32_0 = arith.constant 0 : i32
    %c0_i32_1 = arith.constant 0 : i32
    return %arg0, %c0_i32, %c0_i32_0 : i32, i32, i32
  }
  func.func @transform_1(%arg0: i32) -> (i32, i32, i32) {
    %c0_i32 = arith.constant 0 : i32
    %c0_i32_0 = arith.constant 0 : i32
    %c0_i32_1 = arith.constant 0 : i32
    %c0_i32_2 = arith.constant 0 : i32
    return %c0_i32, %c0_i32_0, %c0_i32_1 : i32, i32, i32
  }
  func.func @transform_2(%arg0: i32) -> (i32, i32) {
    %c0_i32 = arith.constant 0 : i32
    %c0_i32_0 = arith.constant 0 : i32
    %c0_i32_1 = arith.constant 0 : i32
    return %c0_i32, %c0_i32_0 : i32, i32
  }
  func.func @transform_3(%arg0: i32) -> (i32, i32) {
    %c0_i32 = arith.constant 0 : i32
    %c0_i32_0 = arith.constant 0 : i32
    %c0_i32_1 = arith.constant 0 : i32
    return %c0_i32, %c0_i32_0 : i32, i32
  }
  func.func @transform_4(%arg0: i32) -> (i32, i32, i32) {
    %c0_i32 = arith.constant 0 : i32
    %c0_i32_0 = arith.constant 0 : i32
    %c0_i32_1 = arith.constant 0 : i32
    return %arg0, %c0_i32, %c0_i32_0 : i32, i32, i32
  }
}

</mosaic_0001>

<llo_original>
// kernel: tpu_custom_call.1
$region0: #{tpu_custom_call.1}
  #allocation0 [shape = 'u32[]', space=smem, size = 0x4, offset = 0x4, fixed_abs, tag = 'smem constant byte address 0x4 - core index']
  #allocation1 [shape = 'u32[144,128]{1,0:T(1,128)}', space=vmem, size = 0x12000, scoped, tag = 'internal scratch']
  %s0 = inlined_call_operand.hbm [shape: f32[2,16,64], index: 0, kind: input, shape index: {}]
  %s1 = inlined_call_operand.hbm [shape: f32[3,64,128], index: 1, kind: input, shape index: {}]
  %s2 = inlined_call_operand.vmem [shape: f32[1,128], index: 2, kind: input, shape index: {}]
  %s3 = inlined_call_operand.vmem [shape: f32[1,128], index: 3, kind: input, shape index: {}]
  %s4 = inlined_call_operand.hbm [shape: f32[2,16,128], index: 4, kind: output, shape index: {}]
  %s5 = sld [smem:[#allocation0]]
  $region57: #{tpu_custom_call.1} parent=0
    _
  %s7 = ssub.s32 1, %s5
  %s8 = scalar_select 0, %s7, %s5
  $region1: #{tpu_custom_call.1} parent=0
    #allocation2 [shape = 'u8[16384]{0}', space=vmem, size = 0x4000, scoped, tag = 'input window, operand 0']
    #allocation3 [shape = 's32[2]{0}', space=sflag, size = 0x8, scoped, tag = 'scoped memory for tpu_custom_call.1']
    #allocation4 [shape = 's32[2]{0}', space=sflag, size = 0x8, scoped, tag = 'scoped memory for tpu_custom_call.1']
    #allocation5 [shape = 'u8[98304]{0}', space=vmem, size = 0x18000, scoped, tag = 'input window, operand 1, single buffered']
    #allocation6 [shape = 's32[1]{0}', space=sflag, size = 0x4, scoped, tag = 'scoped memory for tpu_custom_call.1']
    #allocation7 [shape = 'u8[16384]{0}', space=vmem, size = 0x4000, scoped, tag = 'output window, operand 0']
    %9 = vsyncpa [#allocation3], 0
    %s10 = scalar_lea.sflag [#allocation3], 1
    %11 = vsyncpa %s10, 0
    %12 = vsyncpa [#allocation6], 0
    %13 = vsyncpa [#allocation4], 0
    %s14 = scalar_lea.sflag [#allocation4], 1
    %15 = vsyncpa %s14, 0
    loop: start=0, step=1, limit=4
    $region2: #{tpu_custom_call.1} parent=1 // loop_pre_header
      _
    $region3: #{tpu_custom_call.1} parent=1 // loop_header
      %s17 = sphi 0, %s21
      %p18 = scmp.ge.s32.totalorder %s17, 4
      %s27 = sphi 0, %s29
      %s30 = sphi 0, %s27
      %s31 = sphi 0, %s30
      %s47 = sphi 0, %s31
      %s51 = sphi 0, %s51
      %s53 = sphi 0, %s51
      %s54 = sphi 0, %s53
      %s68 = sphi 0, %s54
      %s72 = sphi 0, %s72
      %s74 = sphi 0, %s72
      %s75 = sphi 0, %s74
      %s89 = sphi 0, %s75
      %s93 = sphi 0, %s93
      %s95 = sphi 0, %s93
      %s96 = sphi 0, %s95
      %s110 = sphi 0, %s96
      %s116 = sphi 0, %s118
      %s119 = sphi 0, %s116
      %s120 = sphi 0, %s119
      %s136 = sphi 0, %s120
    $region4: #{tpu_custom_call.1} parent=1 // loop_header_branch
      %20 = sbr.rel (%p18) target = $region8
    $region5: #{tpu_custom_call.1} parent=1 // loop_body
      %s22 = ssub.s32 %s17, 1
      %s23 = ssub.s32 %s17, 2
      %s24 = sadd.s32 %s17, 1
      %s25 = ssub.s32 %s17, %s24
      %p26 = scmp.eq.s32.totalorder %s25, 0
      %s28 = sadd.s32 %s27, 1
      %s29 = scalar_select %p26, %s27, %s28
      %p32 = pneg %p26
      %p33 = scmp.eq.s32.totalorder %s17, 1
      %p34 = por %p32, %p33
      %p35 = scmp.ne.s32.totalorder %s27, %s30
      %p36 = scmp.eq.s32.totalorder %s17, 0
      %p37 = por %p35, %p36
      %p38 = scmp.ne.s32.totalorder %s27, %s30
      %p39 = scmp.eq.s32.totalorder %s22, 1
      %p40 = por %p38, %p39
      %p41 = scmp.ne.s32.totalorder %s30, %s31
      %p42 = scmp.eq.s32.totalorder %s22, 0
      %p43 = por %p41, %p42
      %p44 = scmp.ne.s32.totalorder %s30, %s31
      %p45 = scmp.eq.s32.totalorder %s23, 1
      %p46 = por %p44, %p45
      %p48 = scmp.ne.s32.totalorder %s31, %s47
      %p49 = scmp.eq.s32.totalorder %s23, 0
      %p50 = por %p48, %p49
      %s52 = sadd.s32 %s51, 1
      %p55 = scmp.eq.s32.totalorder %s17, 1
      %p56 = scmp.ne.s32.totalorder %s51, %s53
      %p57 = scmp.eq.s32.totalorder %s17, 0
      %p58 = por %p56, %p57
      %p59 = scmp.ne.s32.totalorder %s51, %s53
      %p60 = scmp.eq.s32.totalorder %s22, 1
      %p61 = por %p59, %p60
      %p62 = scmp.ne.s32.totalorder %s53, %s54
      %p63 = scmp.eq.s32.totalorder %s22, 0
      %p64 = por %p62, %p63
      %p65 = scmp.ne.s32.totalorder %s53, %s54
      %p66 = scmp.eq.s32.totalorder %s23, 1
      %p67 = por %p65, %p66
      %p69 = scmp.ne.s32.totalorder %s54, %s68
      %p70 = scmp.eq.s32.totalorder %s23, 0
      %p71 = por %p69, %p70
      %s73 = sadd.s32 %s72, 1
      %p76 = scmp.eq.s32.totalorder %s17, 1
      %p77 = scmp.ne.s32.totalorder %s72, %s74
      %p78 = scmp.eq.s32.totalorder %s17, 0
      %p79 = por %p77, %p78
      %p80 = scmp.ne.s32.totalorder %s72, %s74
      %p81 = scmp.eq.s32.totalorder %s22, 1
      %p82 = por %p80, %p81
      %p83 = scmp.ne.s32.totalorder %s74, %s75
      %p84 = scmp.eq.s32.totalorder %s22, 0
      %p85 = por %p83, %p84
      %p86 = scmp.ne.s32.totalorder %s74, %s75
      %p87 = scmp.eq.s32.totalorder %s23, 1
      %p88 = por %p86, %p87
      %p90 = scmp.ne.s32.totalorder %s75, %s89
      %p91 = scmp.eq.s32.totalorder %s23, 0
      %p92 = por %p90, %p91
      %s94 = sadd.s32 %s93, 1
      %p97 = scmp.eq.s32.totalorder %s17, 1
      %p98 = scmp.ne.s32.totalorder %s93, %s95
      %p99 = scmp.eq.s32.totalorder %s17, 0
      %p100 = por %p98, %p99
      %p101 = scmp.ne.s32.totalorder %s93, %s95
      %p102 = scmp.eq.s32.totalorder %s22, 1
      %p103 = por %p101, %p102
      %p104 = scmp.ne.s32.totalorder %s95, %s96
      %p105 = scmp.eq.s32.totalorder %s22, 0
      %p106 = por %p104, %p105
      %p107 = scmp.ne.s32.totalorder %s95, %s96
      %p108 = scmp.eq.s32.totalorder %s23, 1
      %p109 = por %p107, %p108
      %p111 = scmp.ne.s32.totalorder %s96, %s110
      %p112 = scmp.eq.s32.totalorder %s23, 0
      %p113 = por %p111, %p112
      %s114 = ssub.s32 %s17, %s24
      %p115 = scmp.eq.s32.totalorder %s114, 0
      %s117 = sadd.s32 %s116, 1
      %s118 = scalar_select %p115, %s116, %s117
      %p121 = pneg %p115
      %p122 = scmp.eq.s32.totalorder %s17, 1
      %p123 = por %p121, %p122
      %p124 = scmp.ne.s32.totalorder %s116, %s119
      %p125 = scmp.eq.s32.totalorder %s17, 0
      %p126 = por %p124, %p125
      %p127 = scmp.ne.s32.totalorder %s116, %s119
      %p128 = scmp.eq.s32.totalorder %s22, 1
      %p129 = por %p127, %p128
      %p130 = scmp.ne.s32.totalorder %s119, %s120
      %p131 = scmp.eq.s32.totalorder %s22, 0
      %p132 = por %p130, %p131
      %p133 = scmp.ne.s32.totalorder %s119, %s120
      %p134 = scmp.eq.s32.totalorder %s23, 1
      %p135 = por %p133, %p134
      %p137 = scmp.ne.s32.totalorder %s120, %s136
      %p138 = scmp.eq.s32.totalorder %s23, 0
      %p139 = por %p137, %p138
      %p140 = scmp.le.s32.totalorder 1, %s17
      %p141 = scmp.lt.s32.totalorder %s17, 3
      %p142 = pnand %p140, %p141
      %p143 = pneg %p142
      // Predicated region
      $region9: #{tpu_custom_call.1} parent=5 // pred_check
        _
      $region10: #{tpu_custom_call.1} parent=5 // pred_check_branch
        %145 = sbr.rel (%p142) target = $region12
      $region11: #{tpu_custom_call.1} parent=5 // pred_region
        %s146 = ssub.s32 %s17, 1
        // Predicated region
        $region13: #{tpu_custom_call.1} parent=11 // pred_check
          %p147 = pneg %p64
        $region14: #{tpu_custom_call.1} parent=11 // pred_check_branch
          %149 = sbr.rel (%p147) target = $region16
        $region15: #{tpu_custom_call.1} parent=11 // pred_region
          %s151 = ssub.s32 3072, 3072
          %152 = vsyncadd [#allocation6], %s151
          %s153 = sshll.u32 [#allocation5], 4
          %s154 = int_to_ptr.vmem [resolvable:$true] %s153
          %159 = dma.hbm_to_vmem [thread:$0]  %s1, 3072, %s154, [#allocation6], 128, 128, 8
        $region16: #{tpu_custom_call.1} parent=11 // pred_fallthru
          _
        // Predicated region
        $region17: #{tpu_custom_call.1} parent=11 // pred_check
          %p160 = pneg %p85
        $region18: #{tpu_custom_call.1} parent=11 // pred_check_branch
          %162 = sbr.rel (%p160) target = $region20
        $region19: #{tpu_custom_call.1} parent=11 // pred_region
          _
        $region20: #{tpu_custom_call.1} parent=11 // pred_fallthru
          _
        // Predicated region
        $region21: #{tpu_custom_call.1} parent=11 // pred_check
          %p163 = pneg %p106
        $region22: #{tpu_custom_call.1} parent=11 // pred_check_branch
          %165 = sbr.rel (%p163) target = $region24
        $region23: #{tpu_custom_call.1} parent=11 // pred_region
          _
        $region24: #{tpu_custom_call.1} parent=11 // pred_fallthru
          _
      $region12: #{tpu_custom_call.1} parent=5 // pred_fallthru
        _
      %p166 = scmp.lt.s32.totalorder %s17, 2
      // Predicated region
      $region25: #{tpu_custom_call.1} parent=5 // pred_check
        %p167 = pneg %p166
      $region26: #{tpu_custom_call.1} parent=5 // pred_check_branch
        %169 = sbr.rel (%p167) target = $region28
      $region27: #{tpu_custom_call.1} parent=5 // pred_region
        // Predicated region
        $region29: #{tpu_custom_call.1} parent=27 // pred_check
          %p170 = pneg %p37
        $region30: #{tpu_custom_call.1} parent=27 // pred_check_branch
          %172 = sbr.rel (%p170) target = $region32
        $region31: #{tpu_custom_call.1} parent=27 // pred_region
          %s173 = sand.u32 %s27, 1
          %s174 = scalar_lea.sflag [#allocation3], %s173
          %s175 = sand.u32 %s27, 1
          %s176 = smul.addr %s175, 16
          %s177 = scalar_lea.vmem [#allocation2], %s176
          %s179 = ssub.s32 256, 256
          %180 = vsyncadd %s174, %s179
          %s181 = smul.addr %s17, 2
          %s182 = smul.addr %s181, 128
          %s183 = scalar_lea.hbm %s0, %s182
          %s184 = sshll.u32 %s177, 4
          %s185 = int_to_ptr.vmem [resolvable:$true] %s184
          %190 = dma.hbm_to_vmem [thread:$0]  %s183, 256, %s185, %s174, 128, 128, 8
        $region32: #{tpu_custom_call.1} parent=27 // pred_fallthru
          _
      $region28: #{tpu_custom_call.1} parent=5 // pred_fallthru
        _
      %p191 = scmp.le.s32.totalorder 1, %s17
      %p192 = scmp.lt.s32.totalorder %s17, 3
      %p193 = pnand %p191, %p192
      %p194 = pneg %p193
      // Predicated region
      $region33: #{tpu_custom_call.1} parent=5 // pred_check
        _
      $region34: #{tpu_custom_call.1} parent=5 // pred_check_branch
        %196 = sbr.rel (%p193) target = $region36
      $region35: #{tpu_custom_call.1} parent=5 // pred_region
        %s197 = ssub.s32 %s17, 1
        %s198 = sand.u32 %s30, 1
        %s199 = scalar_lea.sflag [#allocation3], %s198
        %s200 = sand.u32 %s30, 1
        %s201 = smul.addr %s200, 16
        %s202 = scalar_lea.vmem [#allocation2], %s201
        // Predicated region
        $region37: #{tpu_custom_call.1} parent=35 // pred_check
          %p203 = pneg %p43
        $region38: #{tpu_custom_call.1} parent=35 // pred_check_branch
          %205 = sbr.rel (%p203) target = $region40
        $region39: #{tpu_custom_call.1} parent=35 // pred_region
          %206 = dma.done %s199, 256
        $region40: #{tpu_custom_call.1} parent=35 // pred_fallthru
          _
        // Predicated region
        $region41: #{tpu_custom_call.1} parent=35 // pred_check
          %p207 = pneg %p64
        $region42: #{tpu_custom_call.1} parent=35 // pred_check_branch
          %209 = sbr.rel (%p207) target = $region44
        $region43: #{tpu_custom_call.1} parent=35 // pred_region
          %210 = dma.done [#allocation6], 3072
        $region44: #{tpu_custom_call.1} parent=35 // pred_fallthru
          _
        %s211 = sand.u32 %s30, 1
        %s212 = scalar_lea.sflag [#allocation3], %s211
        %s213 = sand.u32 %s30, 1
        %s214 = smul.addr %s213, 16
        %s215 = scalar_lea.vmem [#allocation2], %s214
        %p216 = pneg %p43
        %p217 = pneg %p40
        %p218 = pneg %p64
        %p219 = pneg %p61
        %p220 = pneg %p85
        %p221 = pneg %p82
        %p222 = pneg %p106
        %p223 = pneg %p103
        %p224 = pneg %p132
        %p225 = pneg %p129
        %s226 = sand.u32 %s119, 1
        %s227 = scalar_lea.sflag [#allocation4], %s226
        %s228 = sand.u32 %s119, 1
        %s229 = smul.addr %s228, 16
        %s230 = scalar_lea.vmem [#allocation7], %s229
        %v231 = vld [vmem:[%s202] sm:$0xff]
        %v232 = vld [vmem:[%s202 + $0x8] sm:$0xff]
        %v233 = vlaneseq
        %v234 = vshrl.u32 %v233, 7
        %v235 = vadd.s32 %v234, 8
        %v236 = vlaneseq
        %v237 = vand.u32 %v236, 127
        %v238 = vadd.s32 %v237, 1
        %vm239 = vcmp.eq.s32.totalorder %v234, %v238
        %vm240 = vcmp.eq.s32.totalorder %v235, %v238
        %v241 = vsel %vm239, 1, 0
        %v242 = vsel %vm240, 1, 0
        %v243 = vcvt.s32.f32 %v241
        %v244 = vcvt.s32.f32 %v242
        %v245 = vadd.s32 %v234, 1
        %v246 = vadd.s32 %v235, 1
        %vm247 = vcmp.eq.s32.totalorder %v237, %v245
        %vm248 = vcmp.eq.s32.totalorder %v237, %v246
        %v249 = vsel %vm247, 1, 0
        %v250 = vsel %vm248, 1, 0
        %v251 = vcvt.s32.f32 %v249
        %v252 = vcvt.s32.f32 %v250
        %vm253 = vcmask 130048
        %v255 = vsel %vm253, %v243, 0
        %v258 = vsel %vm253, %v244, 0
        %260 = vmatprep.subr.mxu0 0.0
        %261 = vmatpush1.msra.mxu0 %v231
        %262 = vmatprep.subr.mxu0 0.0
        %263 = vmatpush1.msra.mxu0 %v232
        %264 = vmatprep.subr.mxu0 0.0
        %265 = vmatpush1.msra.mxu0 0.0
        %266 = vmatprep.subr.mxu0 0.0
        %267 = vmatpush1.msra.mxu0 0.0
        %268 = vmatprep.subr.mxu0 0.0
        %269 = vmatpush1.msra.mxu0 0.0
        %270 = vmatprep.subr.mxu0 0.0
        %271 = vmatpush1.msra.mxu0 0.0
        %272 = vmatprep.subr.mxu0 0.0
        %273 = vmatpush1.msra.mxu0 0.0
        %274 = vmatprep.subr.mxu0 0.0
        %275 = vmatpush1.msra.mxu0 0.0
        %276 = vmatprep.subr.mxu0 0.0
        %277 = vmatpush1.msra.mxu0 0.0
        %278 = vmatprep.subr.mxu0 0.0
        %279 = vmatpush1.msra.mxu0 0.0
        %280 = vmatprep.subr.mxu0 0.0
        %281 = vmatpush1.msra.mxu0 0.0
        %282 = vmatprep.subr.mxu0 0.0
        %283 = vmatpush1.msra.mxu0 0.0
        %284 = vmatprep.subr.mxu0 0.0
        %285 = vmatpush1.msra.mxu0 0.0
        %286 = vmatprep.subr.mxu0 0.0
        %287 = vmatpush1.msra.mxu0 0.0
        %288 = vmatprep.subr.mxu0 0.0
        %289 = vmatpush1.msra.mxu0 0.0
        %290 = vmatprep.subr.mxu0 0.0
        %291 = vmatpush1.msra.mxu0 0.0
        %292 = vmatprep.subr.mxu0 0.0
        %293 = vmatpush1.msra.mxu0 0.0
        %294 = vmatprep.subr.mxu0 0.0
        %295 = vmatpush1.msra.mxu0 0.0
        %296 = vmatprep.subr.mxu0 0.0
        %297 = vmatpush1.msra.mxu0 0.0
        %298 = vmatprep.subr.mxu0 0.0
        %299 = vmatpush1.msra.mxu0 0.0
        %300 = vmatprep.subr.mxu0 0.0
        %301 = vmatpush1.msra.mxu0 0.0
        %302 = vmatprep.subr.mxu0 0.0
        %303 = vmatpush1.msra.mxu0 0.0
        %304 = vmatprep.subr.mxu0 0.0
        %305 = vmatpush1.msra.mxu0 0.0
        %306 = vmatprep.subr.mxu0 0.0
        %307 = vmatpush1.msra.mxu0 0.0
        %308 = vmatprep.subr.mxu0 0.0
        %309 = vmatpush1.msra.mxu0 0.0
        %310 = vmatprep.subr.mxu0 0.0
        %311 = vmatpush1.msra.mxu0 0.0
        %312 = vmatprep.subr.mxu0 0.0
        %313 = vmatpush1.msra.mxu0 0.0
        %314 = vmatprep.subr.mxu0 0.0
        %315 = vmatpush1.msra.mxu0 0.0
        %316 = vmatprep.subr.mxu0 0.0
        %317 = vmatpush1.msra.mxu0 0.0
        %318 = vmatprep.subr.mxu0 0.0
        %319 = vmatpush1.msra.mxu0 0.0
        %320 = vmatprep.subr.mxu0 0.0
        %321 = vmatpush1.msra.mxu0 0.0
        %322 = vmatprep.subr.mxu0 0.0
        %323 = vmatpush1.msra.mxu0 0.0
        %324 = vmatprep.mubr.f32.mxu0 0.0
        %325 = vmatmul.mubr.f32.gmra.mrb[0].mxu0 %v255
        %v326 = vpop.f32.mrb[0].mxu0
        %v327 = vadd.f32 0.0, %v326
        %v328 = vpop.f32.mrb[0].mxu0
        %329 = vmatprep.mubr.f32.mxu0 0.0
        %330 = vmatmul.mubr.f32.gmra.mrb[0].mxu0 %v258
        %v331 = vpop.f32.mrb[0].mxu0
        %v332 = vadd.f32 0.0, %v331
        %v333 = vpop.f32.mrb[0].mxu0
        %334 = vdwg.mxu0
        %v336 = vsel %vm253, %v251, 0
        %v339 = vsel %vm253, %v252, 0
        %341 = vmatprep.subr.mxu0 0.0
        %342 = vmatpush1.msra.mxu0 %v231
        %343 = vmatprep.subr.mxu0 0.0
        %344 = vmatpush1.msra.mxu0 %v232
        %345 = vmatprep.subr.mxu0 0.0
        %346 = vmatpush1.msra.mxu0 0.0
        %347 = vmatprep.subr.mxu0 0.0
        %348 = vmatpush1.msra.mxu0 0.0
        %349 = vmatprep.subr.mxu0 0.0
        %350 = vmatpush1.msra.mxu0 0.0
        %351 = vmatprep.subr.mxu0 0.0
        %352 = vmatpush1.msra.mxu0 0.0
        %353 = vmatprep.subr.mxu0 0.0
        %354 = vmatpush1.msra.mxu0 0.0
        %355 = vmatprep.subr.mxu0 0.0
        %356 = vmatpush1.msra.mxu0 0.0
        %357 = vmatprep.subr.mxu0 0.0
        %358 = vmatpush1.msra.mxu0 0.0
        %359 = vmatprep.subr.mxu0 0.0
        %360 = vmatpush1.msra.mxu0 0.0
        %361 = vmatprep.subr.mxu0 0.0
        %362 = vmatpush1.msra.mxu0 0.0
        %363 = vmatprep.subr.mxu0 0.0
        %364 = vmatpush1.msra.mxu0 0.0
        %365 = vmatprep.subr.mxu0 0.0
        %366 = vmatpush1.msra.mxu0 0.0
        %367 = vmatprep.subr.mxu0 0.0
        %368 = vmatpush1.msra.mxu0 0.0
        %369 = vmatprep.subr.mxu0 0.0
        %370 = vmatpush1.msra.mxu0 0.0
        %371 = vmatprep.subr.mxu0 0.0
        %372 = vmatpush1.msra.mxu0 0.0
        %373 = vmatprep.subr.mxu0 0.0
        %374 = vmatpush1.msra.mxu0 0.0
        %375 = vmatprep.subr.mxu0 0.0
        %376 = vmatpush1.msra.mxu0 0.0
        %377 = vmatprep.subr.mxu0 0.0
        %378 = vmatpush1.msra.mxu0 0.0
        %379 = vmatprep.subr.mxu0 0.0
        %380 = vmatpush1.msra.mxu0 0.0
        %381 = vmatprep.subr.mxu0 0.0
        %382 = vmatpush1.msra.mxu0 0.0
        %383 = vmatprep.subr.mxu0 0.0
        %384 = vmatpush1.msra.mxu0 0.0
        %385 = vmatprep.subr.mxu0 0.0
        %386 = vmatpush1.msra.mxu0 0.0
        %387 = vmatprep.subr.mxu0 0.0
        %388 = vmatpush1.msra.mxu0 0.0
        %389 = vmatprep.subr.mxu0 0.0
        %390 = vmatpush1.msra.mxu0 0.0
        %391 = vmatprep.subr.mxu0 0.0
        %392 = vmatpush1.msra.mxu0 0.0
        %393 = vmatprep.subr.mxu0 0.0
        %394 = vmatpush1.msra.mxu0 0.0
        %395 = vmatprep.subr.mxu0 0.0
        %396 = vmatpush1.msra.mxu0 0.0
        %397 = vmatprep.subr.mxu0 0.0
        %398 = vmatpush1.msra.mxu0 0.0
        %399 = vmatprep.subr.mxu0 0.0
        %400 = vmatpush1.msra.mxu0 0.0
        %401 = vmatprep.subr.mxu0 0.0
        %402 = vmatpush1.msra.mxu0 0.0
        %403 = vmatprep.subr.mxu0 0.0
        %404 = vmatpush1.msra.mxu0 0.0
        %405 = vmatprep.mubr.f32.mxu0 0.0
        %406 = vmatmul.mubr.f32.gmra.mrb[0].mxu0 %v336
        %v407 = vpop.f32.mrb[0].mxu0
        %v408 = vadd.f32 0.0, %v407
        %v409 = vpop.f32.mrb[0].mxu0
        %410 = vmatprep.mubr.f32.mxu0 0.0
        %411 = vmatmul.mubr.f32.gmra.mrb[0].mxu0 %v339
        %v412 = vpop.f32.mrb[0].mxu0
        %v413 = vadd.f32 0.0, %v412
        %v414 = vpop.f32.mrb[0].mxu0
        %415 = vdwg.mxu0
        %v416 = vld [vmem:[#allocation5] sm:$0xff]
        %v417 = vld [vmem:[#allocation5 + $0x8] sm:$0xff]
        %v418 = vld [vmem:[#allocation5 + $0x10] sm:$0xff]
        %v419 = vld [vmem:[#allocation5 + $0x18] sm:$0xff]
        %v420 = vld [vmem:[#allocation5 + $0x20] sm:$0xff]
        %v421 = vld [vmem:[#allocation5 + $0x28] sm:$0xff]
        %v422 = vld [vmem:[#allocation5 + $0x30] sm:$0xff]
        %v423 = vld [vmem:[#allocation5 + $0x38] sm:$0xff]
        %s424 = scalar_lea.vmem [#allocation5], 64
        %v425 = vld [vmem:[%s424] sm:$0xff]
        %v426 = vld [vmem:[%s424 + $0x8] sm:$0xff]
        %v427 = vld [vmem:[%s424 + $0x10] sm:$0xff]
        %v428 = vld [vmem:[%s424 + $0x18] sm:$0xff]
        %v429 = vld [vmem:[%s424 + $0x20] sm:$0xff]
        %v430 = vld [vmem:[%s424 + $0x28] sm:$0xff]
        %v431 = vld [vmem:[%s424 + $0x30] sm:$0xff]
        %v432 = vld [vmem:[%s424 + $0x38] sm:$0xff]
        %vm433 = vcmask 523264
        %v435 = vsel %vm433, %v231, 0
        %v438 = vsel %vm433, %v232, 0
        %440 = vmatprep.subr.mxu0 0.0
        %441 = vmatpush1.msra.mxu0 %v425
        %442 = vmatprep.subr.mxu0 0.0
        %443 = vmatpush1.msra.mxu0 %v426
        %444 = vmatprep.subr.mxu0 0.0
        %445 = vmatpush1.msra.mxu0 %v427
        %446 = vmatprep.subr.mxu0 0.0
        %447 = vmatpush1.msra.mxu0 %v428
        %448 = vmatprep.subr.mxu0 0.0
        %449 = vmatpush1.msra.mxu0 %v429
        %450 = vmatprep.subr.mxu0 0.0
        %451 = vmatpush1.msra.mxu0 %v430
        %452 = vmatprep.subr.mxu0 0.0
        %453 = vmatpush1.msra.mxu0 %v431
        %454 = vmatprep.subr.mxu0 0.0
        %455 = vmatpush1.msra.mxu0 %v432
        %456 = vmatprep.subr.mxu0 0.0
        %457 = vmatpush1.msra.mxu0 0.0
        %458 = vmatprep.subr.mxu0 0.0
        %459 = vmatpush1.msra.mxu0 0.0
        %460 = vmatprep.subr.mxu0 0.0
        %461 = vmatpush1.msra.mxu0 0.0
        %462 = vmatprep.subr.mxu0 0.0
        %463 = vmatpush1.msra.mxu0 0.0
        %464 = vmatprep.subr.mxu0 0.0
        %465 = vmatpush1.msra.mxu0 0.0
        %466 = vmatprep.subr.mxu0 0.0
        %467 = vmatpush1.msra.mxu0 0.0
        %468 = vmatprep.subr.mxu0 0.0
        %469 = vmatpush1.msra.mxu0 0.0
        %470 = vmatprep.subr.mxu0 0.0
        %471 = vmatpush1.msra.mxu0 0.0
        %472 = vmatprep.subr.mxu0 0.0
        %473 = vmatpush1.msra.mxu0 0.0
        %474 = vmatprep.subr.mxu0 0.0
        %475 = vmatpush1.msra.mxu0 0.0
        %476 = vmatprep.subr.mxu0 0.0
        %477 = vmatpush1.msra.mxu0 0.0
        %478 = vmatprep.subr.mxu0 0.0
        %479 = vmatpush1.msra.mxu0 0.0
        %480 = vmatprep.subr.mxu0 0.0
        %481 = vmatpush1.msra.mxu0 0.0
        %482 = vmatprep.subr.mxu0 0.0
        %483 = vmatpush1.msra.mxu0 0.0
        %484 = vmatprep.subr.mxu0 0.0
        %485 = vmatpush1.msra.mxu0 0.0
        %486 = vmatprep.subr.mxu0 0.0
        %487 = vmatpush1.msra.mxu0 0.0
        %488 = vmatprep.subr.mxu0 0.0
        %489 = vmatpush1.msra.mxu0 0.0
        %490 = vmatprep.subr.mxu0 0.0
        %491 = vmatpush1.msra.mxu0 0.0
        %492 = vmatprep.subr.mxu0 0.0
        %493 = vmatpush1.msra.mxu0 0.0
        %494 = vmatprep.subr.mxu0 0.0
        %495 = vmatpush1.msra.mxu0 0.0
        %496 = vmatprep.subr.mxu0 0.0
        %497 = vmatpush1.msra.mxu0 0.0
        %498 = vmatprep.subr.mxu0 0.0
        %499 = vmatpush1.msra.mxu0 0.0
        %500 = vmatprep.subr.mxu0 0.0
        %501 = vmatpush1.msra.mxu0 0.0
        %502 = vmatprep.subr.mxu0 0.0
        %503 = vmatpush1.msra.mxu0 0.0
        %504 = vmatprep.mubr.f32.mxu0 0.0
        %505 = vmatmul.mubr.f32.gmra.mrb[0].mxu0 %v435
        %v506 = vpop.f32.mrb[0].mxu0
        %v507 = vadd.f32 0.0, %v506
        %v508 = vpop.f32.mrb[0].mxu0
        %509 = vmatprep.mubr.f32.mxu0 0.0
        %510 = vmatmul.mubr.f32.gmra.mrb[0].mxu0 %v438
        %v511 = vpop.f32.mrb[0].mxu0
        %v512 = vadd.f32 0.0, %v511
        %v513 = vpop.f32.mrb[0].mxu0
        %514 = vdwg.mxu0
        %v516 = vsel %vm433, %v327, 0
        %v519 = vsel %vm433, %v332, 0
        %521 = vmatprep.subr.mxu0 0.0
        %522 = vmatpush1.msra.mxu0 %v416
        %523 = vmatprep.subr.mxu0 0.0
        %524 = vmatpush1.msra.mxu0 %v417
        %525 = vmatprep.subr.mxu0 0.0
        %526 = vmatpush1.msra.mxu0 %v418
        %527 = vmatprep.subr.mxu0 0.0
        %528 = vmatpush1.msra.mxu0 %v419
        %529 = vmatprep.subr.mxu0 0.0
        %530 = vmatpush1.msra.mxu0 %v420
        %531 = vmatprep.subr.mxu0 0.0
        %532 = vmatpush1.msra.mxu0 %v421
        %533 = vmatprep.subr.mxu0 0.0
        %534 = vmatpush1.msra.mxu0 %v422
        %535 = vmatprep.subr.mxu0 0.0
        %536 = vmatpush1.msra.mxu0 %v423
        %537 = vmatprep.subr.mxu0 0.0
        %538 = vmatpush1.msra.mxu0 0.0
        %539 = vmatprep.subr.mxu0 0.0
        %540 = vmatpush1.msra.mxu0 0.0
        %541 = vmatprep.subr.mxu0 0.0
        %542 = vmatpush1.msra.mxu0 0.0
        %543 = vmatprep.subr.mxu0 0.0
        %544 = vmatpush1.msra.mxu0 0.0
        %545 = vmatprep.subr.mxu0 0.0
        %546 = vmatpush1.msra.mxu0 0.0
        %547 = vmatprep.subr.mxu0 0.0
        %548 = vmatpush1.msra.mxu0 0.0
        %549 = vmatprep.subr.mxu0 0.0
        %550 = vmatpush1.msra.mxu0 0.0
        %551 = vmatprep.subr.mxu0 0.0
        %552 = vmatpush1.msra.mxu0 0.0
        %553 = vmatprep.subr.mxu0 0.0
        %554 = vmatpush1.msra.mxu0 0.0
        %555 = vmatprep.subr.mxu0 0.0
        %556 = vmatpush1.msra.mxu0 0.0
        %557 = vmatprep.subr.mxu0 0.0
        %558 = vmatpush1.msra.mxu0 0.0
        %559 = vmatprep.subr.mxu0 0.0
        %560 = vmatpush1.msra.mxu0 0.0
        %561 = vmatprep.subr.mxu0 0.0
        %562 = vmatpush1.msra.mxu0 0.0
        %563 = vmatprep.subr.mxu0 0.0
        %564 = vmatpush1.msra.mxu0 0.0
        %565 = vmatprep.subr.mxu0 0.0
        %566 = vmatpush1.msra.mxu0 0.0
        %567 = vmatprep.subr.mxu0 0.0
        %568 = vmatpush1.msra.mxu0 0.0
        %569 = vmatprep.subr.mxu0 0.0
        %570 = vmatpush1.msra.mxu0 0.0
        %571 = vmatprep.subr.mxu0 0.0
        %572 = vmatpush1.msra.mxu0 0.0
        %573 = vmatprep.subr.mxu0 0.0
        %574 = vmatpush1.msra.mxu0 0.0
        %575 = vmatprep.subr.mxu0 0.0
        %576 = vmatpush1.msra.mxu0 0.0
        %577 = vmatprep.subr.mxu0 0.0
        %578 = vmatpush1.msra.mxu0 0.0
        %579 = vmatprep.subr.mxu0 0.0
        %580 = vmatpush1.msra.mxu0 0.0
        %581 = vmatprep.subr.mxu0 0.0
        %582 = vmatpush1.msra.mxu0 0.0
        %583 = vmatprep.subr.mxu0 0.0
        %584 = vmatpush1.msra.mxu0 0.0
        %585 = vmatprep.mubr.f32.mxu0 0.0
        %586 = vmatmul.mubr.f32.gmra.mrb[0].mxu0 %v516
        %v587 = vpop.f32.mrb[0].mxu0
        %v588 = vadd.f32 %v507, %v587
        %v589 = vpop.f32.mrb[0].mxu0
        %590 = vmatprep.mubr.f32.mxu0 0.0
        %591 = vmatmul.mubr.f32.gmra.mrb[0].mxu0 %v519
        %v592 = vpop.f32.mrb[0].mxu0
        %v593 = vadd.f32 %v512, %v592
        %v594 = vpop.f32.mrb[0].mxu0
        %595 = vdwg.mxu0
        %s596 = scalar_lea.vmem [#allocation5], 128
        %v597 = vld [vmem:[%s596] sm:$0xff]
        %v598 = vld [vmem:[%s596 + $0x8] sm:$0xff]
        %v599 = vld [vmem:[%s596 + $0x10] sm:$0xff]
        %v600 = vld [vmem:[%s596 + $0x18] sm:$0xff]
        %v601 = vld [vmem:[%s596 + $0x20] sm:$0xff]
        %v602 = vld [vmem:[%s596 + $0x28] sm:$0xff]
        %v603 = vld [vmem:[%s596 + $0x30] sm:$0xff]
        %v604 = vld [vmem:[%s596 + $0x38] sm:$0xff]
        %v606 = vsel %vm433, %v408, 0
        %v609 = vsel %vm433, %v413, 0
        %611 = vmatprep.subr.mxu0 0.0
        %612 = vmatpush1.msra.mxu0 %v597
        %613 = vmatprep.subr.mxu0 0.0
        %614 = vmatpush1.msra.mxu0 %v598
        %615 = vmatprep.subr.mxu0 0.0
        %616 = vmatpush1.msra.mxu0 %v599
        %617 = vmatprep.subr.mxu0 0.0
        %618 = vmatpush1.msra.mxu0 %v600
        %619 = vmatprep.subr.mxu0 0.0
        %620 = vmatpush1.msra.mxu0 %v601
        %621 = vmatprep.subr.mxu0 0.0
        %622 = vmatpush1.msra.mxu0 %v602
        %623 = vmatprep.subr.mxu0 0.0
        %624 = vmatpush1.msra.mxu0 %v603
        %625 = vmatprep.subr.mxu0 0.0
        %626 = vmatpush1.msra.mxu0 %v604
        %627 = vmatprep.subr.mxu0 0.0
        %628 = vmatpush1.msra.mxu0 0.0
        %629 = vmatprep.subr.mxu0 0.0
        %630 = vmatpush1.msra.mxu0 0.0
        %631 = vmatprep.subr.mxu0 0.0
        %632 = vmatpush1.msra.mxu0 0.0
        %633 = vmatprep.subr.mxu0 0.0
        %634 = vmatpush1.msra.mxu0 0.0
        %635 = vmatprep.subr.mxu0 0.0
        %636 = vmatpush1.msra.mxu0 0.0
        %637 = vmatprep.subr.mxu0 0.0
        %638 = vmatpush1.msra.mxu0 0.0
        %639 = vmatprep.subr.mxu0 0.0
        %640 = vmatpush1.msra.mxu0 0.0
        %641 = vmatprep.subr.mxu0 0.0
        %642 = vmatpush1.msra.mxu0 0.0
        %643 = vmatprep.subr.mxu0 0.0
        %644 = vmatpush1.msra.mxu0 0.0
        %645 = vmatprep.subr.mxu0 0.0
        %646 = vmatpush1.msra.mxu0 0.0
        %647 = vmatprep.subr.mxu0 0.0
        %648 = vmatpush1.msra.mxu0 0.0
        %649 = vmatprep.subr.mxu0 0.0
        %650 = vmatpush1.msra.mxu0 0.0
        %651 = vmatprep.subr.mxu0 0.0
        %652 = vmatpush1.msra.mxu0 0.0
        %653 = vmatprep.subr.mxu0 0.0
        %654 = vmatpush1.msra.mxu0 0.0
        %655 = vmatprep.subr.mxu0 0.0
        %656 = vmatpush1.msra.mxu0 0.0
        %657 = vmatprep.subr.mxu0 0.0
        %658 = vmatpush1.msra.mxu0 0.0
        %659 = vmatprep.subr.mxu0 0.0
        %660 = vmatpush1.msra.mxu0 0.0
        %661 = vmatprep.subr.mxu0 0.0
        %662 = vmatpush1.msra.mxu0 0.0
        %663 = vmatprep.subr.mxu0 0.0
        %664 = vmatpush1.msra.mxu0 0.0
        %665 = vmatprep.subr.mxu0 0.0
        %666 = vmatpush1.msra.mxu0 0.0
        %667 = vmatprep.subr.mxu0 0.0
        %668 = vmatpush1.msra.mxu0 0.0
        %669 = vmatprep.subr.mxu0 0.0
        %670 = vmatpush1.msra.mxu0 0.0
        %671 = vmatprep.subr.mxu0 0.0
        %672 = vmatpush1.msra.mxu0 0.0
        %673 = vmatprep.subr.mxu0 0.0
        %674 = vmatpush1.msra.mxu0 0.0
        %675 = vmatprep.mubr.f32.mxu0 0.0
        %676 = vmatmul.mubr.f32.gmra.mrb[0].mxu0 %v606
        %v677 = vpop.f32.mrb[0].mxu0
        %v678 = vadd.f32 0.0, %v677
        %v679 = vpop.f32.mrb[0].mxu0
        %680 = vmatprep.mubr.f32.mxu0 0.0
        %681 = vmatmul.mubr.f32.gmra.mrb[0].mxu0 %v609
        %v682 = vpop.f32.mrb[0].mxu0
        %v683 = vadd.f32 0.0, %v682
        %v684 = vpop.f32.mrb[0].mxu0
        %685 = vdwg.mxu0
        %v686 = vadd.f32 %v588, %v678
        %v687 = vadd.f32 %v593, %v683
        %v688 = vld [vmem:[%s2] sm:$0x1]
        %v690 = vlaneseq
        %v691 = vshrl.u32 %v690, 7
        %v692 = vsub.s32 0, %v691
        %v693 = vrot.slane %v688, %v692
        %v695 = vadd.f32 %v686, %v693
        %v696 = vadd.f32 %v687, %v693
        %v697 = vld [vmem:[%s3] sm:$0x1]
        %v698 = vmax.f32 %v695, 0.0
        %v699 = vmax.f32 %v696, 0.0
        %v700 = vsub.f32 %v698, %v695
        %v701 = vsub.f32 %v699, %v696
        %v703 = vlaneseq
        %v704 = vshrl.u32 %v703, 7
        %v705 = vsub.s32 0, %v704
        %v706 = vrot.slane %v697, %v705
        %v708 = vmul.f32 %v706, %v700
        %v709 = vmul.f32 %v706, %v701
        %v710 = vadd.f32 %v695, %v708
        %v711 = vadd.f32 %v696, %v709
        %712 = vst [vmem:[%s230] sm:$0xff] %v710
        %713 = vst [vmem:[%s230 + $0x8] sm:$0xff] %v711
        %s714 = sand.u32 %s119, 1
        %s715 = scalar_lea.sflag [#allocation4], %s714
        %s716 = sand.u32 %s119, 1
        %s717 = smul.addr %s716, 16
        %s718 = scalar_lea.vmem [#allocation7], %s717
        // Predicated region
        $region45: #{tpu_custom_call.1} parent=35 // pred_check
          %p719 = pneg %p129
        $region46: #{tpu_custom_call.1} parent=35 // pred_check_branch
          %721 = sbr.rel (%p719) target = $region48
        $region47: #{tpu_custom_call.1} parent=35 // pred_region
          %s723 = ssub.s32 256, 256
          %724 = vsyncadd %s715, %s723
          %s725 = smul.addr %s22, 2
          %s726 = smul.addr %s725, 128
          %s727 = scalar_lea.hbm %s4, %s726
          %s728 = sshll.u32 %s718, 4
          %s729 = int_to_ptr.vmem [resolvable:$true] %s728
          %734 = dma.vmem_to_hbm [thread:$0]  %s729, 256, %s727, %s715, 128, 128, 8
        $region48: #{tpu_custom_call.1} parent=35 // pred_fallthru
          _
      $region36: #{tpu_custom_call.1} parent=5 // pred_fallthru
        _
      %p735 = scmp.le.s32.totalorder 2, %s17
      // Predicated region
      $region49: #{tpu_custom_call.1} parent=5 // pred_check
        %p736 = pneg %p735
      $region50: #{tpu_custom_call.1} parent=5 // pred_check_branch
        %738 = sbr.rel (%p736) target = $region52
      $region51: #{tpu_custom_call.1} parent=5 // pred_region
        %s739 = ssub.s32 %s17, 2
        // Predicated region
        $region53: #{tpu_custom_call.1} parent=51 // pred_check
          %p740 = pneg %p135
        $region54: #{tpu_custom_call.1} parent=51 // pred_check_branch
          %742 = sbr.rel (%p740) target = $region56
        $region55: #{tpu_custom_call.1} parent=51 // pred_region
          %s743 = sand.u32 %s120, 1
          %s744 = scalar_lea.sflag [#allocation4], %s743
          %s745 = sand.u32 %s120, 1
          %s746 = smul.addr %s745, 16
          %s747 = scalar_lea.vmem [#allocation7], %s746
          %748 = dma.done %s744, 256
        $region56: #{tpu_custom_call.1} parent=51 // pred_fallthru
          _
      $region52: #{tpu_custom_call.1} parent=5 // pred_fallthru
        _
    $region6: #{tpu_custom_call.1} parent=1 // loop_footer
      %s21 = sadd.s32 1, %s17
    $region7: #{tpu_custom_call.1} parent=1 // loop_footer_branch
      %16 = sbr.rel target = $region3
    $region8: #{tpu_custom_call.1} parent=1 // loop_exit
      _
    %749 = vsyncpa [#allocation3], 1
    %s750 = scalar_lea.sflag [#allocation3], 1
    %751 = vsyncpa %s750, 1
    %752 = vsyncpa [#allocation6], 1
    %753 = vsyncpa [#allocation4], 1
    %s754 = scalar_lea.sflag [#allocation4], 1
    %755 = vsyncpa %s754, 1

</llo_original>
